<compile_context>
chip_gen: v7x
topology: tpu7x:2x2x1
jax: 0.10.0
libtpu: 0.0.40
codegen_flags: <defaults>
</compile_context>

<pallas_src>
import functools

import jax
import jax.numpy as jnp
from jax import lax
from jax.experimental import pallas as pl
from jax.experimental.pallas import tpu as pltpu


def _gelu(x):
    # exact (erf-based) GELU — matches torch.nn.functional.gelu default
    return 0.5 * x * (1.0 + lax.erf(x * 0.7071067811865476))


def feedforward_kernel(x_ref, w1t_ref, wdw_ref, w2t_ref, mask_ref, o_ref, *, W):
    # x_ref    : (1, C, Nt)  Bt images; channels on sublanes, Nt = Bt*H*W lanes
    # w1t_ref  : (C4, C)     pointwise conv #1, transposed to [c_out, c_in]
    # wdw_ref  : (C4, 9)     depthwise 3x3 taps, [channel, ky*3 + kx]
    # w2t_ref  : (C, C4)     pointwise conv #2, transposed to [c_out, c_in]
    # mask_ref : (4, Nt)     f32 neighbour-exists masks: [left, right, up, down]
    # o_ref    : (1, C, Nt)
    x = x_ref[0].astype(jnp.float32)                         # (C, Nt)
    Nt = x.shape[-1]

    # ---- 1x1 conv (pointwise) as a lane-dense matmul, then exact GELU.
    h1 = jnp.dot(w1t_ref[...], x, preferred_element_type=jnp.float32)
    h1 = _gelu(h1)                                           # (C4, Nt)

    wdw = wdw_ref[...].astype(jnp.float32)                   # (C4, 9)
    m = mask_ref[...]                                        # (4, Nt) f32
    m_lf = m[0:1, :]   # neighbour at dx = -1 exists
    m_rt = m[1:2, :]   # neighbour at dx = +1 exists
    m_up = m[2:3, :]   # neighbour at dy = -1 exists
    m_dn = m[3:4, :]   # neighbour at dy = +1 exists

    # ---- depthwise 3x3, padding=1: shared horizontal pass + vertical combine.
    # roll(x, s)[j] = x[j - s]  (circular); wrap-around is neutralized by the
    # per-image masks (computed from lane % (H*W) in the wrapper).
    left = m_lf * pltpu.roll(h1, shift=1, axis=1)            # masked h1[j-1]
    right = m_rt * pltpu.roll(h1, shift=Nt - 1, axis=1)      # masked h1[j+1]

    # per-dy partial rows (weight flat index k = (dy+1)*3 + (dx+1))
    part_m1 = wdw[:, 0:1] * left + wdw[:, 1:2] * h1 + wdw[:, 2:3] * right
    part_00 = wdw[:, 3:4] * left + wdw[:, 4:5] * h1 + wdw[:, 5:6] * right
    part_p1 = wdw[:, 6:7] * left + wdw[:, 7:8] * h1 + wdw[:, 8:9] * right

    # vertical combine: two independent terms, summed at the end.
    up_term = m_up * pltpu.roll(part_m1, shift=W, axis=1)      # part_m1[j - W]
    dn_term = m_dn * pltpu.roll(part_p1, shift=Nt - W, axis=1)  # part_p1[j + W]
    acc = (part_00 + up_term) + dn_term

    h2 = _gelu(acc)                                           # (C4, Nt)

    # ---- final 1x1 conv; lane-dense (unmasked) store.
    out = jnp.dot(w2t_ref[...], h2, preferred_element_type=jnp.float32)
    o_ref[0] = out.astype(o_ref.dtype)


def _choose_images_per_block(B):
    """Largest divisor of B that still leaves >= 2 grid steps (>=1 if B == 1)."""
    target_steps = 2 if B >= 2 else 1
    for cand in range(B, 0, -1):
        if B % cand == 0 and B // cand >= target_steps:
            return cand
    return 1


def feedforward(x, w1, w_dw, w2, *, images_per_block=None):
    """x: (B, H, W, C) NHWC;  w1: (C, C4);  w_dw: (3, 3, C4);  w2: (C4, C)."""
    B, H, W, C = x.shape
    C4 = w1.shape[1]
    N = H * W

    Bt = images_per_block if images_per_block is not None else _choose_images_per_block(B)
    assert B % Bt == 0
    G = B // Bt
    Nt = Bt * N

    # Layout plumbing outside the kernel (single XLA transpose pass each way):
    # give the kernel a lane-dense (C, Bt*H*W) slab per grid step plus
    # transposed weights.
    x_t = x.reshape(G, Bt, H, W, C).transpose(0, 4, 1, 2, 3).reshape(G, C, Nt)
    w1_t = jnp.transpose(w1)                                  # (C4, C)
    w2_t = jnp.transpose(w2)                                  # (C, C4)
    wdw_t = jnp.transpose(w_dw.reshape(9, C4))                # (C4, 9)

    # Precomputed neighbour-exists masks, built from the PER-IMAGE lane index
    # so circular rolls never bleed across folded images.
    pos = jnp.arange(Nt, dtype=jnp.int32) % N
    row = pos // W
    col = pos % W
    masks = jnp.stack(
        [col >= 1, col <= W - 2, row >= 1, row <= H - 2], axis=0
    ).astype(jnp.float32)                                     # (4, Nt)

    # Explicit VMEM budget (double-buffered IO blocks + in-kernel intermediates),
    # clamped to <= 32 MiB (safe on v7x's 64 MiB physical VMEM).
    io_bytes = 2 * 2 * C * Nt * 4
    interm_bytes = 8 * C4 * Nt * 4
    vmem_limit = int(min(32 << 20, max(4 << 20, 4 * (io_bytes + interm_bytes))))

    kernel = functools.partial(feedforward_kernel, W=W)
    out_t = pl.pallas_call(
        kernel,
        out_shape=jax.ShapeDtypeStruct((G, C, Nt), x.dtype),
        grid_spec=pltpu.PrefetchScalarGridSpec(
            num_scalar_prefetch=0,
            grid=(G,),
            in_specs=[
                pl.BlockSpec((1, C, Nt), lambda g: (g, 0, 0)),
                pl.BlockSpec((C4, C), lambda g: (0, 0)),
                pl.BlockSpec((C4, 9), lambda g: (0, 0)),
                pl.BlockSpec((C, C4), lambda g: (0, 0)),
                pl.BlockSpec((4, Nt), lambda g: (0, 0)),
            ],
            out_specs=pl.BlockSpec((1, C, Nt), lambda g: (g, 0, 0)),
        ),
        compiler_params=pltpu.CompilerParams(
            dimension_semantics=("parallel",),
            vmem_limit_bytes=vmem_limit,
        ),
    )(x_t, w1_t, wdw_t, w2_t, masks)

    return out_t.reshape(G, C, Bt, H, W).transpose(0, 2, 3, 4, 1).reshape(B, H, W, C)


def feedforward_ref(x, w1, w_dw, w2):
    """Pure-JAX reference with identical semantics (for verification)."""
    B, H, W, C = x.shape
    h1 = _gelu(jnp.einsum("bhwc,cf->bhwf", x, w1))
    hp = jnp.pad(h1, ((0, 0), (1, 1), (1, 1), (0, 0)))
    acc = jnp.zeros_like(h1)
    for ky in range(3):
        for kx in range(3):
            acc = acc + hp[:, ky:ky + H, kx:kx + W, :] * w_dw[ky, kx, :]
    h2 = _gelu(acc)
    return jnp.einsum("bhwf,fc->bhwc", h2, w2)


if __name__ == "__main__":
    # Small shapes consistent with the module: dim=4, mult=4, 16x16 spatial, batch=2.
    B, H, W, DIM, MULT = 2, 16, 16, 4, 4
    C4 = DIM * MULT

    key = jax.random.PRNGKey(0)
    kx, k1, kd, k2 = jax.random.split(key, 4)

    x = jax.random.normal(kx, (B, H, W, DIM), dtype=jnp.float32)
    # Deterministic synthetic parameters (conv weights, no bias).
    w1 = jax.random.normal(k1, (DIM, C4), dtype=jnp.float32) * 0.1     # 1x1: c -> 4c
    w_dw = jax.random.normal(kd, (3, 3, C4), dtype=jnp.float32) * 0.1  # depthwise 3x3
    w2 = jax.random.normal(k2, (C4, DIM), dtype=jnp.float32) * 0.1     # 1x1: 4c -> c

    out = feedforward(x, w1, w_dw, w2)
    out = jax.block_until_ready(out)

    ref = feedforward_ref(x, w1, w_dw, w2)
    assert out.shape == (B, H, W, DIM), out.shape
    assert jnp.allclose(out, ref, atol=1e-4, rtol=1e-4), float(
        jnp.max(jnp.abs(out - ref)))

    print("KERNEL_OK")
</pallas_src>

<mosaic_0001>
module attributes {stable_mosaic.version = 11 : i64} {
  func.func @feedforward_kernel(%arg0: i32, %arg1: memref<1x4x256xf32, #tpu.memory_space<vmem>>, %arg2: memref<16x4xf32, #tpu.memory_space<vmem>>, %arg3: memref<16x9xf32, #tpu.memory_space<vmem>>, %arg4: memref<4x16xf32, #tpu.memory_space<vmem>>, %arg5: memref<4x256xf32, #tpu.memory_space<vmem>>, %arg6: memref<1x4x256xf32, #tpu.memory_space<vmem>>) attributes {dimension_semantics = [#tpu.dimension_semantics<parallel>], iteration_bounds = array<i64: 2>, scalar_prefetch = 0 : i64, scratch_operands = 0 : i64, tpu.core_type = #tpu.core_type<tc>, window_params = [{transform_indices = @transform_0, window_bounds = array<i64: 1, 4, 256>}, {pipeline_mode = #tpu.pipeline_mode<synchronous>, transform_indices = @transform_1, window_bounds = array<i64: 16, 4>}, {pipeline_mode = #tpu.pipeline_mode<synchronous>, transform_indices = @transform_2, window_bounds = array<i64: 16, 9>}, {pipeline_mode = #tpu.pipeline_mode<synchronous>, transform_indices = @transform_3, window_bounds = array<i64: 4, 16>}, {pipeline_mode = #tpu.pipeline_mode<synchronous>, transform_indices = @transform_4, window_bounds = array<i64: 4, 256>}, {transform_indices = @transform_5, window_bounds = array<i64: 1, 4, 256>}]} {
    %c0 = arith.constant 0 : index
    %c0_0 = arith.constant 0 : index
    %c0_1 = arith.constant 0 : index
    %0 = vector.load %arg1[%c0, %c0_0, %c0_1] : memref<1x4x256xf32, #tpu.memory_space<vmem>>, vector<1x4x256xf32>
    %1 = vector.shape_cast %0 : vector<1x4x256xf32> to vector<4x256xf32>
    %c0_2 = arith.constant 0 : index
    %c0_3 = arith.constant 0 : index
    %2 = vector.load %arg2[%c0_2, %c0_3] : memref<16x4xf32, #tpu.memory_space<vmem>>, vector<16x4xf32>
    %cst = arith.constant dense<0.000000e+00> : vector<16x256xf32>
    %3 = tpu.matmul %2, %1, %cst {dimension_numbers = #tpu.dot_dimension_numbers<[1], [0], [0], [1], [0, 0, 1, 1], [], []>} : vector<16x4xf32>, vector<4x256xf32>, vector<16x256xf32> -> vector<16x256xf32>
    %cst_4 = arith.constant 5.000000e-01 : f32
    %4 = vector.broadcast %cst_4 : f32 to vector<16x256xf32>
    %5 = arith.mulf %4, %3 : vector<16x256xf32>
    %cst_5 = arith.constant 0.707106769 : f32
    %6 = vector.broadcast %cst_5 : f32 to vector<16x256xf32>
    %7 = arith.mulf %3, %6 : vector<16x256xf32>
    %8 = math.erf %7 : vector<16x256xf32>
    %cst_6 = arith.constant 1.000000e+00 : f32
    %9 = vector.broadcast %cst_6 : f32 to vector<16x256xf32>
    %10 = arith.addf %9, %8 : vector<16x256xf32>
    %11 = arith.mulf %5, %10 : vector<16x256xf32>
    %c0_7 = arith.constant 0 : index
    %c0_8 = arith.constant 0 : index
    %12 = vector.load %arg3[%c0_7, %c0_8] : memref<16x9xf32, #tpu.memory_space<vmem>>, vector<16x9xf32>
    %c0_9 = arith.constant 0 : index
    %c0_10 = arith.constant 0 : index
    %13 = vector.load %arg5[%c0_9, %c0_10] : memref<4x256xf32, #tpu.memory_space<vmem>>, vector<4x256xf32>
    %14 = vector.extract_strided_slice %13 {offsets = [0, 0], sizes = [1, 256], strides = [1, 1]} : vector<4x256xf32> to vector<1x256xf32>
    %15 = vector.extract_strided_slice %13 {offsets = [1, 0], sizes = [1, 256], strides = [1, 1]} : vector<4x256xf32> to vector<1x256xf32>
    %16 = vector.extract_strided_slice %13 {offsets = [2, 0], sizes = [1, 256], strides = [1, 1]} : vector<4x256xf32> to vector<1x256xf32>
    %17 = vector.extract_strided_slice %13 {offsets = [3, 0], sizes = [1, 256], strides = [1, 1]} : vector<4x256xf32> to vector<1x256xf32>
    %c1_i32 = arith.constant 1 : i32
    %18 = tpu.dynamic_rotate %11 by %c1_i32 dim 1 : vector<16x256xf32>, i32 -> vector<16x256xf32>
    %19 = vector.broadcast %14 : vector<1x256xf32> to vector<16x256xf32>
    %20 = arith.mulf %19, %18 : vector<16x256xf32>
    %c255_i32 = arith.constant 255 : i32
    %21 = tpu.dynamic_rotate %11 by %c255_i32 dim 1 : vector<16x256xf32>, i32 -> vector<16x256xf32>
    %22 = vector.broadcast %15 : vector<1x256xf32> to vector<16x256xf32>
    %23 = arith.mulf %22, %21 : vector<16x256xf32>
    %24 = vector.extract_strided_slice %12 {offsets = [0, 0], sizes = [16, 1], strides = [1, 1]} : vector<16x9xf32> to vector<16x1xf32>
    %25 = vector.broadcast %24 : vector<16x1xf32> to vector<16x256xf32>
    %26 = arith.mulf %25, %20 : vector<16x256xf32>
    %27 = vector.extract_strided_slice %12 {offsets = [0, 1], sizes = [16, 1], strides = [1, 1]} : vector<16x9xf32> to vector<16x1xf32>
    %28 = vector.broadcast %27 : vector<16x1xf32> to vector<16x256xf32>
    %29 = arith.mulf %28, %11 : vector<16x256xf32>
    %30 = arith.addf %26, %29 : vector<16x256xf32>
    %31 = vector.extract_strided_slice %12 {offsets = [0, 2], sizes = [16, 1], strides = [1, 1]} : vector<16x9xf32> to vector<16x1xf32>
    %32 = vector.broadcast %31 : vector<16x1xf32> to vector<16x256xf32>
    %33 = arith.mulf %32, %23 : vector<16x256xf32>
    %34 = arith.addf %30, %33 : vector<16x256xf32>
    %35 = vector.extract_strided_slice %12 {offsets = [0, 3], sizes = [16, 1], strides = [1, 1]} : vector<16x9xf32> to vector<16x1xf32>
    %36 = vector.broadcast %35 : vector<16x1xf32> to vector<16x256xf32>
    %37 = arith.mulf %36, %20 : vector<16x256xf32>
    %38 = vector.extract_strided_slice %12 {offsets = [0, 4], sizes = [16, 1], strides = [1, 1]} : vector<16x9xf32> to vector<16x1xf32>
    %39 = vector.broadcast %38 : vector<16x1xf32> to vector<16x256xf32>
    %40 = arith.mulf %39, %11 : vector<16x256xf32>
    %41 = arith.addf %37, %40 : vector<16x256xf32>
    %42 = vector.extract_strided_slice %12 {offsets = [0, 5], sizes = [16, 1], strides = [1, 1]} : vector<16x9xf32> to vector<16x1xf32>
    %43 = vector.broadcast %42 : vector<16x1xf32> to vector<16x256xf32>
    %44 = arith.mulf %43, %23 : vector<16x256xf32>
    %45 = arith.addf %41, %44 : vector<16x256xf32>
    %46 = vector.extract_strided_slice %12 {offsets = [0, 6], sizes = [16, 1], strides = [1, 1]} : vector<16x9xf32> to vector<16x1xf32>
    %47 = vector.broadcast %46 : vector<16x1xf32> to vector<16x256xf32>
    %48 = arith.mulf %47, %20 : vector<16x256xf32>
    %49 = vector.extract_strided_slice %12 {offsets = [0, 7], sizes = [16, 1], strides = [1, 1]} : vector<16x9xf32> to vector<16x1xf32>
    %50 = vector.broadcast %49 : vector<16x1xf32> to vector<16x256xf32>
    %51 = arith.mulf %50, %11 : vector<16x256xf32>
    %52 = arith.addf %48, %51 : vector<16x256xf32>
    %53 = vector.extract_strided_slice %12 {offsets = [0, 8], sizes = [16, 1], strides = [1, 1]} : vector<16x9xf32> to vector<16x1xf32>
    %54 = vector.broadcast %53 : vector<16x1xf32> to vector<16x256xf32>
    %55 = arith.mulf %54, %23 : vector<16x256xf32>
    %56 = arith.addf %52, %55 : vector<16x256xf32>
    %c16_i32 = arith.constant 16 : i32
    %57 = tpu.dynamic_rotate %34 by %c16_i32 dim 1 : vector<16x256xf32>, i32 -> vector<16x256xf32>
    %58 = vector.broadcast %16 : vector<1x256xf32> to vector<16x256xf32>
    %59 = arith.mulf %58, %57 : vector<16x256xf32>
    %c240_i32 = arith.constant 240 : i32
    %60 = tpu.dynamic_rotate %56 by %c240_i32 dim 1 : vector<16x256xf32>, i32 -> vector<16x256xf32>
    %61 = vector.broadcast %17 : vector<1x256xf32> to vector<16x256xf32>
    %62 = arith.mulf %61, %60 : vector<16x256xf32>
    %63 = arith.addf %45, %59 : vector<16x256xf32>
    %64 = arith.addf %63, %62 : vector<16x256xf32>
    %cst_11 = arith.constant 5.000000e-01 : f32
    %65 = vector.broadcast %cst_11 : f32 to vector<16x256xf32>
    %66 = arith.mulf %65, %64 : vector<16x256xf32>
    %cst_12 = arith.constant 0.707106769 : f32
    %67 = vector.broadcast %cst_12 : f32 to vector<16x256xf32>
    %68 = arith.mulf %64, %67 : vector<16x256xf32>
    %69 = math.erf %68 : vector<16x256xf32>
    %cst_13 = arith.constant 1.000000e+00 : f32
    %70 = vector.broadcast %cst_13 : f32 to vector<16x256xf32>
    %71 = arith.addf %70, %69 : vector<16x256xf32>
    %72 = arith.mulf %66, %71 : vector<16x256xf32>
    %c0_14 = arith.constant 0 : index
    %c0_15 = arith.constant 0 : index
    %73 = vector.load %arg4[%c0_14, %c0_15] : memref<4x16xf32, #tpu.memory_space<vmem>>, vector<4x16xf32>
    %cst_16 = arith.constant dense<0.000000e+00> : vector<4x256xf32>
    %74 = tpu.matmul %73, %72, %cst_16 {dimension_numbers = #tpu.dot_dimension_numbers<[1], [0], [0], [1], [0, 0, 1, 1], [], []>} : vector<4x16xf32>, vector<16x256xf32>, vector<4x256xf32> -> vector<4x256xf32>
    %c0_17 = arith.constant 0 : index
    %c0_18 = arith.constant 0 : index
    %c0_19 = arith.constant 0 : index
    %75 = vector.load %arg6[%c0_17, %c0_18, %c0_19] : memref<1x4x256xf32, #tpu.memory_space<vmem>>, vector<1x4x256xf32>
    %76 = vector.shape_cast %75 : vector<1x4x256xf32> to vector<4x256xf32>
    %77 = vector.shape_cast %74 : vector<4x256xf32> to vector<1x4x256xf32>
    tpu.vector_store %arg6[%c0_17, %c0_18, %c0_19], %77 {strides = array<i32>} : memref<1x4x256xf32, #tpu.memory_space<vmem>>, vector<1x4x256xf32>,
    return
  }
  func.func @transform_0(%arg0: i32) -> (i32, i32, i32) {
    %c0_i32 = arith.constant 0 : i32
    %c0_i32_0 = arith.constant 0 : i32
    %c0_i32_1 = arith.constant 0 : i32
    return %arg0, %c0_i32, %c0_i32_0 : i32, i32, i32
  }
  func.func @transform_1(%arg0: i32) -> (i32, i32) {
    %c0_i32 = arith.constant 0 : i32
    %c0_i32_0 = arith.constant 0 : i32
    %c0_i32_1 = arith.constant 0 : i32
    return %c0_i32, %c0_i32_0 : i32, i32
  }
  func.func @transform_2(%arg0: i32) -> (i32, i32) {
    %c0_i32 = arith.constant 0 : i32
    %c0_i32_0 = arith.constant 0 : i32
    %c0_i32_1 = arith.constant 0 : i32
    return %c0_i32, %c0_i32_0 : i32, i32
  }
  func.func @transform_3(%arg0: i32) -> (i32, i32) {
    %c0_i32 = arith.constant 0 : i32
    %c0_i32_0 = arith.constant 0 : i32
    %c0_i32_1 = arith.constant 0 : i32
    return %c0_i32, %c0_i32_0 : i32, i32
  }
  func.func @transform_4(%arg0: i32) -> (i32, i32) {
    %c0_i32 = arith.constant 0 : i32
    %c0_i32_0 = arith.constant 0 : i32
    %c0_i32_1 = arith.constant 0 : i32
    return %c0_i32, %c0_i32_0 : i32, i32
  }
  func.func @transform_5(%arg0: i32) -> (i32, i32, i32) {
    %c0_i32 = arith.constant 0 : i32
    %c0_i32_0 = arith.constant 0 : i32
    %c0_i32_1 = arith.constant 0 : i32
    return %arg0, %c0_i32, %c0_i32_0 : i32, i32, i32
  }
}

</mosaic_0001>

<llo_original>
// kernel: tpu_custom_call.1
$region0: #{tpu_custom_call.1}
  #allocation0 [shape = 'u32[]', space=smem, size = 0x4, offset = 0x4, fixed_abs, tag = 'smem constant byte address 0x4 - core index']
  #allocation1 [shape = 'u32[144,128]{1,0:T(1,128)}', space=vmem, size = 0x12000, scoped, tag = 'internal scratch']
  %s0 = inlined_call_operand.vmem [shape: f32[2,4,256], index: 0, kind: input, shape index: {}]
  %s1 = inlined_call_operand.vmem [shape: f32[16,4], index: 1, kind: input, shape index: {}]
  %s2 = inlined_call_operand.hbm [shape: f32[16,9], index: 2, kind: input, shape index: {}]
  %s3 = inlined_call_operand.vmem [shape: f32[4,16], index: 3, kind: input, shape index: {}]
  %s4 = inlined_call_operand.vmem [shape: f32[4,256], index: 4, kind: input, shape index: {}]
  %s5 = inlined_call_operand.hbm [shape: f32[2,4,256], index: 5, kind: output, shape index: {}]
  %s6 = sld [smem:[#allocation0]]
  $region57: #{tpu_custom_call.1} parent=0
    _
  %s8 = ssub.s32 1, %s6
  %s9 = scalar_select 0, %s8, %s6
  $region1: #{tpu_custom_call.1} parent=0
    #allocation2 [shape = 'u8[8192]{0}', space=vmem, size = 0x2000, scoped, tag = 'input window, operand 2, single buffered']
    #allocation3 [shape = 's32[2]{0}', space=sflag, size = 0x8, scoped, tag = 'scoped memory for tpu_custom_call.1']
    #allocation4 [shape = 's32[2]{0}', space=sflag, size = 0x8, scoped, tag = 'scoped memory for tpu_custom_call.1']
    #allocation5 [shape = 'u8[8192]{0}', space=vmem, size = 0x2000, scoped, tag = 'output window, operand 0']
    %10 = vsyncpa [#allocation3], 0
    %11 = vsyncpa [#allocation4], 0
    %s12 = scalar_lea.sflag [#allocation4], 1
    %13 = vsyncpa %s12, 0
    loop: start=0, step=1, limit=4
    $region2: #{tpu_custom_call.1} parent=1 // loop_pre_header
      _
    $region3: #{tpu_custom_call.1} parent=1 // loop_header
      %s15 = sphi 0, %s19
      %p16 = scmp.ge.s32.totalorder %s15, 4
      %s25 = sphi 0, %s27
      %s28 = sphi 0, %s25
      %s29 = sphi 0, %s28
      %s45 = sphi 0, %s29
      %s49 = sphi 0, %s49
      %s51 = sphi 0, %s49
      %s52 = sphi 0, %s51
      %s66 = sphi 0, %s52
      %s70 = sphi 0, %s70
      %s72 = sphi 0, %s70
      %s73 = sphi 0, %s72
      %s87 = sphi 0, %s73
      %s91 = sphi 0, %s91
      %s93 = sphi 0, %s91
      %s94 = sphi 0, %s93
      %s108 = sphi 0, %s94
      %s112 = sphi 0, %s112
      %s114 = sphi 0, %s112
      %s115 = sphi 0, %s114
      %s129 = sphi 0, %s115
      %s135 = sphi 0, %s137
      %s138 = sphi 0, %s135
      %s139 = sphi 0, %s138
      %s155 = sphi 0, %s139
    $region4: #{tpu_custom_call.1} parent=1 // loop_header_branch
      %18 = sbr.rel (%p16) target = $region8
    $region5: #{tpu_custom_call.1} parent=1 // loop_body
      %s20 = ssub.s32 %s15, 1
      %s21 = ssub.s32 %s15, 2
      %s22 = sadd.s32 %s15, 1
      %s23 = ssub.s32 %s15, %s22
      %p24 = scmp.eq.s32.totalorder %s23, 0
      %s26 = sadd.s32 %s25, 1
      %s27 = scalar_select %p24, %s25, %s26
      %p30 = pneg %p24
      %p31 = scmp.eq.s32.totalorder %s15, 1
      %p32 = por %p30, %p31
      %p33 = scmp.ne.s32.totalorder %s25, %s28
      %p34 = scmp.eq.s32.totalorder %s15, 0
      %p35 = por %p33, %p34
      %p36 = scmp.ne.s32.totalorder %s25, %s28
      %p37 = scmp.eq.s32.totalorder %s20, 1
      %p38 = por %p36, %p37
      %p39 = scmp.ne.s32.totalorder %s28, %s29
      %p40 = scmp.eq.s32.totalorder %s20, 0
      %p41 = por %p39, %p40
      %p42 = scmp.ne.s32.totalorder %s28, %s29
      %p43 = scmp.eq.s32.totalorder %s21, 1
      %p44 = por %p42, %p43
      %p46 = scmp.ne.s32.totalorder %s29, %s45
      %p47 = scmp.eq.s32.totalorder %s21, 0
      %p48 = por %p46, %p47
      %s50 = sadd.s32 %s49, 1
      %p53 = scmp.eq.s32.totalorder %s15, 1
      %p54 = scmp.ne.s32.totalorder %s49, %s51
      %p55 = scmp.eq.s32.totalorder %s15, 0
      %p56 = por %p54, %p55
      %p57 = scmp.ne.s32.totalorder %s49, %s51
      %p58 = scmp.eq.s32.totalorder %s20, 1
      %p59 = por %p57, %p58
      %p60 = scmp.ne.s32.totalorder %s51, %s52
      %p61 = scmp.eq.s32.totalorder %s20, 0
      %p62 = por %p60, %p61
      %p63 = scmp.ne.s32.totalorder %s51, %s52
      %p64 = scmp.eq.s32.totalorder %s21, 1
      %p65 = por %p63, %p64
      %p67 = scmp.ne.s32.totalorder %s52, %s66
      %p68 = scmp.eq.s32.totalorder %s21, 0
      %p69 = por %p67, %p68
      %s71 = sadd.s32 %s70, 1
      %p74 = scmp.eq.s32.totalorder %s15, 1
      %p75 = scmp.ne.s32.totalorder %s70, %s72
      %p76 = scmp.eq.s32.totalorder %s15, 0
      %p77 = por %p75, %p76
      %p78 = scmp.ne.s32.totalorder %s70, %s72
      %p79 = scmp.eq.s32.totalorder %s20, 1
      %p80 = por %p78, %p79
      %p81 = scmp.ne.s32.totalorder %s72, %s73
      %p82 = scmp.eq.s32.totalorder %s20, 0
      %p83 = por %p81, %p82
      %p84 = scmp.ne.s32.totalorder %s72, %s73
      %p85 = scmp.eq.s32.totalorder %s21, 1
      %p86 = por %p84, %p85
      %p88 = scmp.ne.s32.totalorder %s73, %s87
      %p89 = scmp.eq.s32.totalorder %s21, 0
      %p90 = por %p88, %p89
      %s92 = sadd.s32 %s91, 1
      %p95 = scmp.eq.s32.totalorder %s15, 1
      %p96 = scmp.ne.s32.totalorder %s91, %s93
      %p97 = scmp.eq.s32.totalorder %s15, 0
      %p98 = por %p96, %p97
      %p99 = scmp.ne.s32.totalorder %s91, %s93
      %p100 = scmp.eq.s32.totalorder %s20, 1
      %p101 = por %p99, %p100
      %p102 = scmp.ne.s32.totalorder %s93, %s94
      %p103 = scmp.eq.s32.totalorder %s20, 0
      %p104 = por %p102, %p103
      %p105 = scmp.ne.s32.totalorder %s93, %s94
      %p106 = scmp.eq.s32.totalorder %s21, 1
      %p107 = por %p105, %p106
      %p109 = scmp.ne.s32.totalorder %s94, %s108
      %p110 = scmp.eq.s32.totalorder %s21, 0
      %p111 = por %p109, %p110
      %s113 = sadd.s32 %s112, 1
      %p116 = scmp.eq.s32.totalorder %s15, 1
      %p117 = scmp.ne.s32.totalorder %s112, %s114
      %p118 = scmp.eq.s32.totalorder %s15, 0
      %p119 = por %p117, %p118
      %p120 = scmp.ne.s32.totalorder %s112, %s114
      %p121 = scmp.eq.s32.totalorder %s20, 1
      %p122 = por %p120, %p121
      %p123 = scmp.ne.s32.totalorder %s114, %s115
      %p124 = scmp.eq.s32.totalorder %s20, 0
      %p125 = por %p123, %p124
      %p126 = scmp.ne.s32.totalorder %s114, %s115
      %p127 = scmp.eq.s32.totalorder %s21, 1
      %p128 = por %p126, %p127
      %p130 = scmp.ne.s32.totalorder %s115, %s129
      %p131 = scmp.eq.s32.totalorder %s21, 0
      %p132 = por %p130, %p131
      %s133 = ssub.s32 %s15, %s22
      %p134 = scmp.eq.s32.totalorder %s133, 0
      %s136 = sadd.s32 %s135, 1
      %s137 = scalar_select %p134, %s135, %s136
      %p140 = pneg %p134
      %p141 = scmp.eq.s32.totalorder %s15, 1
      %p142 = por %p140, %p141
      %p143 = scmp.ne.s32.totalorder %s135, %s138
      %p144 = scmp.eq.s32.totalorder %s15, 0
      %p145 = por %p143, %p144
      %p146 = scmp.ne.s32.totalorder %s135, %s138
      %p147 = scmp.eq.s32.totalorder %s20, 1
      %p148 = por %p146, %p147
      %p149 = scmp.ne.s32.totalorder %s138, %s139
      %p150 = scmp.eq.s32.totalorder %s20, 0
      %p151 = por %p149, %p150
      %p152 = scmp.ne.s32.totalorder %s138, %s139
      %p153 = scmp.eq.s32.totalorder %s21, 1
      %p154 = por %p152, %p153
      %p156 = scmp.ne.s32.totalorder %s139, %s155
      %p157 = scmp.eq.s32.totalorder %s21, 0
      %p158 = por %p156, %p157
      %p159 = scmp.le.s32.totalorder 1, %s15
      %p160 = scmp.lt.s32.totalorder %s15, 3
      %p161 = pnand %p159, %p160
      %p162 = pneg %p161
      // Predicated region
      $region9: #{tpu_custom_call.1} parent=5 // pred_check
        _
      $region10: #{tpu_custom_call.1} parent=5 // pred_check_branch
        %164 = sbr.rel (%p161) target = $region12
      $region11: #{tpu_custom_call.1} parent=5 // pred_region
        %s165 = ssub.s32 %s15, 1
        // Predicated region
        $region13: #{tpu_custom_call.1} parent=11 // pred_check
          %p166 = pneg %p62
        $region14: #{tpu_custom_call.1} parent=11 // pred_check_branch
          %168 = sbr.rel (%p166) target = $region16
        $region15: #{tpu_custom_call.1} parent=11 // pred_region
          _
        $region16: #{tpu_custom_call.1} parent=11 // pred_fallthru
          _
        // Predicated region
        $region17: #{tpu_custom_call.1} parent=11 // pred_check
          %p169 = pneg %p83
        $region18: #{tpu_custom_call.1} parent=11 // pred_check_branch
          %171 = sbr.rel (%p169) target = $region20
        $region19: #{tpu_custom_call.1} parent=11 // pred_region
          %s173 = ssub.s32 256, 256
          %174 = vsyncadd [#allocation3], %s173
          %s175 = sshll.u32 [#allocation2], 4
          %s176 = int_to_ptr.vmem [resolvable:$true] %s175
          %181 = dma.hbm_to_vmem [thread:$0]  %s2, 256, %s176, [#allocation3], 128, 128, 8
        $region20: #{tpu_custom_call.1} parent=11 // pred_fallthru
          _
        // Predicated region
        $region21: #{tpu_custom_call.1} parent=11 // pred_check
          %p182 = pneg %p104
        $region22: #{tpu_custom_call.1} parent=11 // pred_check_branch
          %184 = sbr.rel (%p182) target = $region24
        $region23: #{tpu_custom_call.1} parent=11 // pred_region
          _
        $region24: #{tpu_custom_call.1} parent=11 // pred_fallthru
          _
        // Predicated region
        $region25: #{tpu_custom_call.1} parent=11 // pred_check
          %p185 = pneg %p125
        $region26: #{tpu_custom_call.1} parent=11 // pred_check_branch
          %187 = sbr.rel (%p185) target = $region28
        $region27: #{tpu_custom_call.1} parent=11 // pred_region
          _
        $region28: #{tpu_custom_call.1} parent=11 // pred_fallthru
          _
      $region12: #{tpu_custom_call.1} parent=5 // pred_fallthru
        _
      %p188 = scmp.lt.s32.totalorder %s15, 2
      // Predicated region
      $region29: #{tpu_custom_call.1} parent=5 // pred_check
        %p189 = pneg %p188
      $region30: #{tpu_custom_call.1} parent=5 // pred_check_branch
        %191 = sbr.rel (%p189) target = $region32
      $region31: #{tpu_custom_call.1} parent=5 // pred_region
        // Predicated region
        $region33: #{tpu_custom_call.1} parent=31 // pred_check
          %p192 = pneg %p35
        $region34: #{tpu_custom_call.1} parent=31 // pred_check_branch
          %194 = sbr.rel (%p192) target = $region36
        $region35: #{tpu_custom_call.1} parent=31 // pred_region
          %p195 = scmp.lt.s32.totalorder %s15, 1
          %s196 = scalar_select %p195, %s15, 1
          %s197 = smul.addr %s196, 2
          %s198 = smul.addr %s197, 4
          %s199 = scalar_lea.vmem %s0, %s198
        $region36: #{tpu_custom_call.1} parent=31 // pred_fallthru
          _
      $region32: #{tpu_custom_call.1} parent=5 // pred_fallthru
        _
      %p200 = scmp.le.s32.totalorder 1, %s15
      %p201 = scmp.lt.s32.totalorder %s15, 3
      %p202 = pnand %p200, %p201
      %p203 = pneg %p202
      // Predicated region
      $region37: #{tpu_custom_call.1} parent=5 // pred_check
        _
      $region38: #{tpu_custom_call.1} parent=5 // pred_check_branch
        %205 = sbr.rel (%p202) target = $region40
      $region39: #{tpu_custom_call.1} parent=5 // pred_region
        %s206 = ssub.s32 %s15, 1
        // Predicated region
        $region41: #{tpu_custom_call.1} parent=39 // pred_check
          %p207 = pneg %p83
        $region42: #{tpu_custom_call.1} parent=39 // pred_check_branch
          %209 = sbr.rel (%p207) target = $region44
        $region43: #{tpu_custom_call.1} parent=39 // pred_region
          %210 = dma.done [#allocation3], 256
        $region44: #{tpu_custom_call.1} parent=39 // pred_fallthru
          _
        %p211 = scmp.lt.s32.totalorder %s20, 1
        %s212 = scalar_select %p211, %s20, 1
        %s213 = smul.addr %s212, 2
        %s214 = smul.addr %s213, 4
        %s215 = scalar_lea.vmem %s0, %s214
        %p216 = pneg %p41
        %p217 = pneg %p38
        %p218 = pneg %p62
        %p219 = pneg %p59
        %p220 = pneg %p83
        %p221 = pneg %p80
        %p222 = pneg %p104
        %p223 = pneg %p101
        %p224 = pneg %p125
        %p225 = pneg %p122
        %p226 = pneg %p151
        %p227 = pneg %p148
        %s228 = sand.u32 %s138, 1
        %s229 = scalar_lea.sflag [#allocation4], %s228
        %s230 = sand.u32 %s138, 1
        %s231 = smul.addr %s230, 8
        %s232 = scalar_lea.vmem [#allocation5], %s231
        %p233 = scmp.lt.s32.totalorder %s20, 1
        %s234 = scalar_select %p233, %s20, 1
        %s235 = smul.addr %s234, 2
        %s236 = smul.addr %s235, 4
        %s237 = scalar_lea.vmem %s0, %s236
        %v238 = vld [vmem:[%s237] sm:$0xff]
        %v239 = vld [vmem:[%s1] sm:$0xff]
        %v240 = vld [vmem:[%s1 + $0x8] sm:$0xff]
        %v242 = vcombine.high %v238, %v238
        %vm243 = vcmask 31744
        %v245 = vsel %vm243, %v239, 0
        %v248 = vsel %vm243, %v240, 0
        %vm250 = vcmask 1043456
        %v251 = vsel %vm250, %v238, 0
        %v253 = vsel %vm250, %v242, 0
        %255 = vmatprep.subr.mxu0 %v253
        %256 = vmatpush1.msra.mxu0 %v251
        %257 = vmatprep.subr.mxu0 0.0
        %258 = vmatpush1.msra.mxu0 0.0
        %259 = vmatprep.subr.mxu0 0.0
        %260 = vmatpush1.msra.mxu0 0.0
        %261 = vmatprep.subr.mxu0 0.0
        %262 = vmatpush1.msra.mxu0 0.0
        %263 = vmatprep.subr.mxu0 0.0
        %264 = vmatpush1.msra.mxu0 0.0
        %265 = vmatprep.subr.mxu0 0.0
        %266 = vmatpush1.msra.mxu0 0.0
        %267 = vmatprep.subr.mxu0 0.0
        %268 = vmatpush1.msra.mxu0 0.0
        %269 = vmatprep.subr.mxu0 0.0
        %270 = vmatpush1.msra.mxu0 0.0
        %271 = vmatprep.subr.mxu0 0.0
        %272 = vmatpush1.msra.mxu0 0.0
        %273 = vmatprep.subr.mxu0 0.0
        %274 = vmatpush1.msra.mxu0 0.0
        %275 = vmatprep.subr.mxu0 0.0
        %276 = vmatpush1.msra.mxu0 0.0
        %277 = vmatprep.subr.mxu0 0.0
        %278 = vmatpush1.msra.mxu0 0.0
        %279 = vmatprep.subr.mxu0 0.0
        %280 = vmatpush1.msra.mxu0 0.0
        %281 = vmatprep.subr.mxu0 0.0
        %282 = vmatpush1.msra.mxu0 0.0
        %283 = vmatprep.subr.mxu0 0.0
        %284 = vmatpush1.msra.mxu0 0.0
        %285 = vmatprep.subr.mxu0 0.0
        %286 = vmatpush1.msra.mxu0 0.0
        %287 = vmatprep.subr.mxu0 0.0
        %288 = vmatpush1.msra.mxu0 0.0
        %289 = vmatprep.subr.mxu0 0.0
        %290 = vmatpush1.msra.mxu0 0.0
        %291 = vmatprep.subr.mxu0 0.0
        %292 = vmatpush1.msra.mxu0 0.0
        %293 = vmatprep.subr.mxu0 0.0
        %294 = vmatpush1.msra.mxu0 0.0
        %295 = vmatprep.subr.mxu0 0.0
        %296 = vmatpush1.msra.mxu0 0.0
        %297 = vmatprep.subr.mxu0 0.0
        %298 = vmatpush1.msra.mxu0 0.0
        %299 = vmatprep.subr.mxu0 0.0
        %300 = vmatpush1.msra.mxu0 0.0
        %301 = vmatprep.subr.mxu0 0.0
        %302 = vmatpush1.msra.mxu0 0.0
        %303 = vmatprep.subr.mxu0 0.0
        %304 = vmatpush1.msra.mxu0 0.0
        %305 = vmatprep.subr.mxu0 0.0
        %306 = vmatpush1.msra.mxu0 0.0
        %307 = vmatprep.subr.mxu0 0.0
        %308 = vmatpush1.msra.mxu0 0.0
        %309 = vmatprep.subr.mxu0 0.0
        %310 = vmatpush1.msra.mxu0 0.0
        %311 = vmatprep.subr.mxu0 0.0
        %312 = vmatpush1.msra.mxu0 0.0
        %313 = vmatprep.subr.mxu0 0.0
        %314 = vmatpush1.msra.mxu0 0.0
        %315 = vmatprep.subr.mxu0 0.0
        %316 = vmatpush1.msra.mxu0 0.0
        %317 = vmatprep.subr.mxu0 0.0
        %318 = vmatpush1.msra.mxu0 0.0
        %319 = vmatprep.mubr.f32.mxu0 0.0
        %320 = vmatmul.mubr.f32.gmra.mrb[0].mxu0 %v245
        %v321 = vpop.f32.mrb[0].mxu0
        %v322 = vadd.f32 0.0, %v321
        %v323 = vpop.f32.mrb[0].mxu0
        %v324 = vadd.f32 0.0, %v323
        %325 = vmatprep.mubr.f32.mxu0 0.0
        %326 = vmatmul.mubr.f32.gmra.mrb[0].mxu0 %v248
        %v327 = vpop.f32.mrb[0].mxu0
        %v328 = vadd.f32 0.0, %v327
        %v329 = vpop.f32.mrb[0].mxu0
        %v330 = vadd.f32 0.0, %v329
        %331 = vdwg.mxu0
        %v332 = vmul.f32 %v322, 0.5
        %v333 = vmul.f32 %v324, 0.5
        %v334 = vmul.f32 %v328, 0.5
        %v335 = vmul.f32 %v330, 0.5
        %v336 = vmul.f32 %v322, 0.70710677
        %v337 = vmul.f32 %v324, 0.70710677
        %v338 = vmul.f32 %v328, 0.70710677
        %v339 = vmul.f32 %v330, 0.70710677
        %v340 = verf.f32.pop %v336
        %v341 = verf.f32.pop %v337
        %v342 = verf.f32.pop %v338
        %v343 = verf.f32.pop %v339
        %v344 = vadd.f32 %v340, 1.0
        %v345 = vadd.f32 %v341, 1.0
        %v346 = vadd.f32 %v342, 1.0
        %v347 = vadd.f32 %v343, 1.0
        %v348 = vmul.f32 %v332, %v344
        %v349 = vmul.f32 %v333, %v345
        %v350 = vmul.f32 %v334, %v346
        %v351 = vmul.f32 %v335, %v347
        %v352 = vld [vmem:[#allocation2] sm:$0xff]
        %v353 = vld [vmem:[#allocation2 + $0x8] sm:$0xff]
        %v354 = vld [vmem:[%s4] sm:$0xff]
        %355 = vrot.lane.b32.xlu0 %v348, 1
        %v356 = vpop.permute.xlu0 %355
        %357 = vrot.lane.b32.xlu0 %v350, 1
        %v358 = vpop.permute.xlu0 %357
        %359 = vrot.lane.b32.xlu0 %v349, 1
        %v360 = vpop.permute.xlu0 %359
        %361 = vrot.lane.b32.xlu0 %v351, 1
        %v362 = vpop.permute.xlu0 %361
        %v363 = vlaneseq
        %v364 = vand.u32 %v363, 127
        %vm365 = vcmp.lt.s32.totalorder %v364, 1
        %v366 = vsel %vm365, %v356, %v360
        %v367 = vsel %vm365, %v358, %v362
        %v368 = vsel %vm365, %v360, %v356
        %v369 = vsel %vm365, %v362, %v358
        %v371 = vlaneseq
        %v372 = vshrl.u32 %v371, 7
        %v373 = vsub.s32 0, %v372
        %v374 = vrot.slane %v354, %v373
        %v375 = vlaneseq
        %v376 = vshrl.u32 %v375, 7
        %v377 = vsub.s32 4, %v376
        %v378 = vrot.slane %v354, %v377
        %v381 = vlaneseq
        %v382 = vshrl.u32 %v381, 7
        %v383 = vsub.s32 0, %v382
        %v384 = vrot.slane %v374, %v383
        %v385 = vlaneseq
        %v386 = vshrl.u32 %v385, 7
        %v387 = vsub.s32 0, %v386
        %v388 = vrot.slane %v378, %v387
        %v389 = vmul.f32 %v384, %v368
        %v390 = vmul.f32 %v388, %v366
        %v391 = vmul.f32 %v384, %v369
        %v392 = vmul.f32 %v388, %v367
        %393 = vrot.lane.b32.xlu0 %v348, 127
        %v394 = vpop.permute.xlu0 %393
        %395 = vrot.lane.b32.xlu0 %v350, 127
        %v396 = vpop.permute.xlu0 %395
        %397 = vrot.lane.b32.xlu0 %v349, 127
        %v398 = vpop.permute.xlu0 %397
        %399 = vrot.lane.b32.xlu0 %v351, 127
        %v400 = vpop.permute.xlu0 %399
        %vm401 = vcmp.lt.s32.totalorder %v364, 127
        %v402 = vsel %vm401, %v394, %v398
        %v403 = vsel %vm401, %v396, %v400
        %v404 = vsel %vm401, %v398, %v394
        %v405 = vsel %vm401, %v400, %v396
        %v406 = vlaneseq
        %v407 = vshrl.u32 %v406, 7
        %v408 = vsub.s32 1, %v407
        %v409 = vrot.slane %v354, %v408
        %v410 = vlaneseq
        %v411 = vshrl.u32 %v410, 7
        %v412 = vsub.s32 5, %v411
        %v413 = vrot.slane %v354, %v412
        %v416 = vlaneseq
        %v417 = vshrl.u32 %v416, 7
        %v418 = vsub.s32 1, %v417
        %v419 = vrot.slane %v409, %v418
        %v420 = vlaneseq
        %v421 = vshrl.u32 %v420, 7
        %v422 = vsub.s32 1, %v421
        %v423 = vrot.slane %v413, %v422
        %v424 = vmul.f32 %v419, %v402
        %v425 = vmul.f32 %v423, %v404
        %v426 = vmul.f32 %v419, %v403
        %v427 = vmul.f32 %v423, %v405
        %429 = vset.pattern.permute.xlu0 0
        %430 = vperm.xlu0 %429, %v352
        %v431 = vpop.permute.xlu0 %430
        %434 = vset.pattern.permute.xlu0 0
        %435 = vperm.xlu0 %434, %v353
        %v436 = vpop.permute.xlu0 %435
        %v438 = vmul.f32 %v431, %v389
        %v439 = vmul.f32 %v431, %v390
        %v440 = vmul.f32 %v436, %v391
        %v441 = vmul.f32 %v436, %v392
        %442 = vset.pattern.permute.xlu0 1
        %443 = vperm.xlu0 %442, %v352
        %v444 = vpop.permute.xlu0 %443
        %446 = vset.pattern.permute.xlu0 1
        %447 = vperm.xlu0 %446, %v353
        %v448 = vpop.permute.xlu0 %447
        %v450 = vmul.f32 %v444, %v348
        %v451 = vmul.f32 %v444, %v349
        %v452 = vmul.f32 %v448, %v350
        %v453 = vmul.f32 %v448, %v351
        %v454 = vadd.f32 %v438, %v450
        %v455 = vadd.f32 %v439, %v451
        %v456 = vadd.f32 %v440, %v452
        %v457 = vadd.f32 %v441, %v453
        %458 = vset.pattern.permute.xlu0 2
        %459 = vperm.xlu0 %458, %v352
        %v460 = vpop.permute.xlu0 %459
        %462 = vset.pattern.permute.xlu0 2
        %463 = vperm.xlu0 %462, %v353
        %v464 = vpop.permute.xlu0 %463
        %v466 = vmul.f32 %v460, %v424
        %v467 = vmul.f32 %v460, %v425
        %v468 = vmul.f32 %v464, %v426
        %v469 = vmul.f32 %v464, %v427
        %v470 = vadd.f32 %v454, %v466
        %v471 = vadd.f32 %v455, %v467
        %v472 = vadd.f32 %v456, %v468
        %v473 = vadd.f32 %v457, %v469
        %474 = vset.pattern.permute.xlu0 3
        %475 = vperm.xlu0 %474, %v352
        %v476 = vpop.permute.xlu0 %475
        %478 = vset.pattern.permute.xlu0 3
        %479 = vperm.xlu0 %478, %v353
        %v480 = vpop.permute.xlu0 %479
        %v482 = vmul.f32 %v476, %v389
        %v483 = vmul.f32 %v476, %v390
        %v484 = vmul.f32 %v480, %v391
        %v485 = vmul.f32 %v480, %v392
        %486 = vset.pattern.permute.xlu0 4
        %487 = vperm.xlu0 %486, %v352
        %v488 = vpop.permute.xlu0 %487
        %490 = vset.pattern.permute.xlu0 4
        %491 = vperm.xlu0 %490, %v353
        %v492 = vpop.permute.xlu0 %491
        %v494 = vmul.f32 %v488, %v348
        %v495 = vmul.f32 %v488, %v349
        %v496 = vmul.f32 %v492, %v350
        %v497 = vmul.f32 %v492, %v351
        %v498 = vadd.f32 %v482, %v494
        %v499 = vadd.f32 %v483, %v495
        %v500 = vadd.f32 %v484, %v496
        %v501 = vadd.f32 %v485, %v497
        %502 = vset.pattern.permute.xlu0 5
        %503 = vperm.xlu0 %502, %v352
        %v504 = vpop.permute.xlu0 %503
        %506 = vset.pattern.permute.xlu0 5
        %507 = vperm.xlu0 %506, %v353
        %v508 = vpop.permute.xlu0 %507
        %v510 = vmul.f32 %v504, %v424
        %v511 = vmul.f32 %v504, %v425
        %v512 = vmul.f32 %v508, %v426
        %v513 = vmul.f32 %v508, %v427
        %v514 = vadd.f32 %v498, %v510
        %v515 = vadd.f32 %v499, %v511
        %v516 = vadd.f32 %v500, %v512
        %v517 = vadd.f32 %v501, %v513
        %518 = vset.pattern.permute.xlu0 6
        %519 = vperm.xlu0 %518, %v352
        %v520 = vpop.permute.xlu0 %519
        %522 = vset.pattern.permute.xlu0 6
        %523 = vperm.xlu0 %522, %v353
        %v524 = vpop.permute.xlu0 %523
        %v526 = vmul.f32 %v520, %v389
        %v527 = vmul.f32 %v520, %v390
        %v528 = vmul.f32 %v524, %v391
        %v529 = vmul.f32 %v524, %v392
        %530 = vset.pattern.permute.xlu0 7
        %531 = vperm.xlu0 %530, %v352
        %v532 = vpop.permute.xlu0 %531
        %534 = vset.pattern.permute.xlu0 7
        %535 = vperm.xlu0 %534, %v353
        %v536 = vpop.permute.xlu0 %535
        %v538 = vmul.f32 %v532, %v348
        %v539 = vmul.f32 %v532, %v349
        %v540 = vmul.f32 %v536, %v350
        %v541 = vmul.f32 %v536, %v351
        %v542 = vadd.f32 %v526, %v538
        %v543 = vadd.f32 %v527, %v539
        %v544 = vadd.f32 %v528, %v540
        %v545 = vadd.f32 %v529, %v541
        %546 = vset.pattern.permute.xlu0 8
        %547 = vperm.xlu0 %546, %v352
        %v548 = vpop.permute.xlu0 %547
        %550 = vset.pattern.permute.xlu0 8
        %551 = vperm.xlu0 %550, %v353
        %v552 = vpop.permute.xlu0 %551
        %v554 = vmul.f32 %v548, %v424
        %v555 = vmul.f32 %v548, %v425
        %v556 = vmul.f32 %v552, %v426
        %v557 = vmul.f32 %v552, %v427
        %v558 = vadd.f32 %v542, %v554
        %v559 = vadd.f32 %v543, %v555
        %v560 = vadd.f32 %v544, %v556
        %v561 = vadd.f32 %v545, %v557
        %562 = vrot.lane.b32.xlu0 %v470, 16
        %v563 = vpop.permute.xlu0 %562
        %564 = vrot.lane.b32.xlu0 %v472, 16
        %v565 = vpop.permute.xlu0 %564
        %566 = vrot.lane.b32.xlu0 %v471, 16
        %v567 = vpop.permute.xlu0 %566
        %568 = vrot.lane.b32.xlu0 %v473, 16
        %v569 = vpop.permute.xlu0 %568
        %vm570 = vcmp.lt.s32.totalorder %v364, 16
        %v571 = vsel %vm570, %v563, %v567
        %v572 = vsel %vm570, %v565, %v569
        %v573 = vsel %vm570, %v567, %v563
        %v574 = vsel %vm570, %v569, %v565
        %v575 = vlaneseq
        %v576 = vshrl.u32 %v575, 7
        %v577 = vsub.s32 2, %v576
        %v578 = vrot.slane %v354, %v577
        %v579 = vlaneseq
        %v580 = vshrl.u32 %v579, 7
        %v581 = vsub.s32 6, %v580
        %v582 = vrot.slane %v354, %v581
        %v585 = vlaneseq
        %v586 = vshrl.u32 %v585, 7
        %v587 = vsub.s32 2, %v586
        %v588 = vrot.slane %v578, %v587
        %v589 = vlaneseq
        %v590 = vshrl.u32 %v589, 7
        %v591 = vsub.s32 2, %v590
        %v592 = vrot.slane %v582, %v591
        %v593 = vmul.f32 %v588, %v573
        %v594 = vmul.f32 %v592, %v571
        %v595 = vmul.f32 %v588, %v574
        %v596 = vmul.f32 %v592, %v572
        %597 = vrot.lane.b32.xlu0 %v558, 112
        %v598 = vpop.permute.xlu0 %597
        %599 = vrot.lane.b32.xlu0 %v560, 112
        %v600 = vpop.permute.xlu0 %599
        %601 = vrot.lane.b32.xlu0 %v559, 112
        %v602 = vpop.permute.xlu0 %601
        %603 = vrot.lane.b32.xlu0 %v561, 112
        %v604 = vpop.permute.xlu0 %603
        %vm605 = vcmp.lt.s32.totalorder %v364, 112
        %v606 = vsel %vm605, %v598, %v602
        %v607 = vsel %vm605, %v600, %v604
        %v608 = vsel %vm605, %v602, %v598
        %v609 = vsel %vm605, %v604, %v600
        %v610 = vlaneseq
        %v611 = vshrl.u32 %v610, 7
        %v612 = vsub.s32 3, %v611
        %v613 = vrot.slane %v354, %v612
        %v614 = vlaneseq
        %v615 = vshrl.u32 %v614, 7
        %v616 = vsub.s32 7, %v615
        %v617 = vrot.slane %v354, %v616
        %v620 = vlaneseq
        %v621 = vshrl.u32 %v620, 7
        %v622 = vsub.s32 3, %v621
        %v623 = vrot.slane %v613, %v622
        %v624 = vlaneseq
        %v625 = vshrl.u32 %v624, 7
        %v626 = vsub.s32 3, %v625
        %v627 = vrot.slane %v617, %v626
        %v628 = vmul.f32 %v623, %v606
        %v629 = vmul.f32 %v627, %v608
        %v630 = vmul.f32 %v623, %v607
        %v631 = vmul.f32 %v627, %v609
        %v632 = vadd.f32 %v514, %v593
        %v633 = vadd.f32 %v515, %v594
        %v634 = vadd.f32 %v516, %v595
        %v635 = vadd.f32 %v517, %v596
        %v636 = vadd.f32 %v632, %v628
        %v637 = vadd.f32 %v633, %v629
        %v638 = vadd.f32 %v634, %v630
        %v639 = vadd.f32 %v635, %v631
        %v640 = vmul.f32 %v636, 0.5
        %v641 = vmul.f32 %v637, 0.5
        %v642 = vmul.f32 %v638, 0.5
        %v643 = vmul.f32 %v639, 0.5
        %v644 = vmul.f32 %v636, 0.70710677
        %v645 = vmul.f32 %v637, 0.70710677
        %v646 = vmul.f32 %v638, 0.70710677
        %v647 = vmul.f32 %v639, 0.70710677
        %v648 = verf.f32.pop %v644
        %v649 = verf.f32.pop %v645
        %v650 = verf.f32.pop %v646
        %v651 = verf.f32.pop %v647
        %v652 = vadd.f32 %v648, 1.0
        %v653 = vadd.f32 %v649, 1.0
        %v654 = vadd.f32 %v650, 1.0
        %v655 = vadd.f32 %v651, 1.0
        %v656 = vmul.f32 %v640, %v652
        %v657 = vmul.f32 %v641, %v653
        %v658 = vmul.f32 %v642, %v654
        %v659 = vmul.f32 %v643, %v655
        %v660 = vld [vmem:[%s3] sm:$0xf]
        %vm661 = vcmask 130048
        %v663 = vsel %vm661, %v660, 0
        %665 = vmatprep.subr.mxu0 %v657
        %666 = vmatpush1.msra.mxu0 %v656
        %667 = vmatprep.subr.mxu0 %v659
        %668 = vmatpush1.msra.mxu0 %v658
        %669 = vmatprep.subr.mxu0 0.0
        %670 = vmatpush1.msra.mxu0 0.0
        %671 = vmatprep.subr.mxu0 0.0
        %672 = vmatpush1.msra.mxu0 0.0
        %673 = vmatprep.subr.mxu0 0.0
        %674 = vmatpush1.msra.mxu0 0.0
        %675 = vmatprep.subr.mxu0 0.0
        %676 = vmatpush1.msra.mxu0 0.0
        %677 = vmatprep.subr.mxu0 0.0
        %678 = vmatpush1.msra.mxu0 0.0
        %679 = vmatprep.subr.mxu0 0.0
        %680 = vmatpush1.msra.mxu0 0.0
        %681 = vmatprep.subr.mxu0 0.0
        %682 = vmatpush1.msra.mxu0 0.0
        %683 = vmatprep.subr.mxu0 0.0
        %684 = vmatpush1.msra.mxu0 0.0
        %685 = vmatprep.subr.mxu0 0.0
        %686 = vmatpush1.msra.mxu0 0.0
        %687 = vmatprep.subr.mxu0 0.0
        %688 = vmatpush1.msra.mxu0 0.0
        %689 = vmatprep.subr.mxu0 0.0
        %690 = vmatpush1.msra.mxu0 0.0
        %691 = vmatprep.subr.mxu0 0.0
        %692 = vmatpush1.msra.mxu0 0.0
        %693 = vmatprep.subr.mxu0 0.0
        %694 = vmatpush1.msra.mxu0 0.0
        %695 = vmatprep.subr.mxu0 0.0
        %696 = vmatpush1.msra.mxu0 0.0
        %697 = vmatprep.subr.mxu0 0.0
        %698 = vmatpush1.msra.mxu0 0.0
        %699 = vmatprep.subr.mxu0 0.0
        %700 = vmatpush1.msra.mxu0 0.0
        %701 = vmatprep.subr.mxu0 0.0
        %702 = vmatpush1.msra.mxu0 0.0
        %703 = vmatprep.subr.mxu0 0.0
        %704 = vmatpush1.msra.mxu0 0.0
        %705 = vmatprep.subr.mxu0 0.0
        %706 = vmatpush1.msra.mxu0 0.0
        %707 = vmatprep.subr.mxu0 0.0
        %708 = vmatpush1.msra.mxu0 0.0
        %709 = vmatprep.subr.mxu0 0.0
        %710 = vmatpush1.msra.mxu0 0.0
        %711 = vmatprep.subr.mxu0 0.0
        %712 = vmatpush1.msra.mxu0 0.0
        %713 = vmatprep.subr.mxu0 0.0
        %714 = vmatpush1.msra.mxu0 0.0
        %715 = vmatprep.subr.mxu0 0.0
        %716 = vmatpush1.msra.mxu0 0.0
        %717 = vmatprep.subr.mxu0 0.0
        %718 = vmatpush1.msra.mxu0 0.0
        %719 = vmatprep.subr.mxu0 0.0
        %720 = vmatpush1.msra.mxu0 0.0
        %721 = vmatprep.subr.mxu0 0.0
        %722 = vmatpush1.msra.mxu0 0.0
        %723 = vmatprep.subr.mxu0 0.0
        %724 = vmatpush1.msra.mxu0 0.0
        %725 = vmatprep.subr.mxu0 0.0
        %726 = vmatpush1.msra.mxu0 0.0
        %727 = vmatprep.subr.mxu0 0.0
        %728 = vmatpush1.msra.mxu0 0.0
        %729 = vmatprep.mubr.f32.mxu0 0.0
        %730 = vmatmul.mubr.f32.gmra.mrb[0].mxu0 %v663
        %v731 = vpop.f32.mrb[0].mxu0
        %v732 = vadd.f32 0.0, %v731
        %v733 = vpop.f32.mrb[0].mxu0
        %v734 = vadd.f32 0.0, %v733
        %735 = vdwg.mxu0
        %v738 = vcombine.low %v732, %v734
        %740 = vst [vmem:[%s232] sm:$0xff] %v738
        %s741 = sand.u32 %s138, 1
        %s742 = scalar_lea.sflag [#allocation4], %s741
        %s743 = sand.u32 %s138, 1
        %s744 = smul.addr %s743, 8
        %s745 = scalar_lea.vmem [#allocation5], %s744
        // Predicated region
        $region45: #{tpu_custom_call.1} parent=39 // pred_check
          %p746 = pneg %p148
        $region46: #{tpu_custom_call.1} parent=39 // pred_check_branch
          %748 = sbr.rel (%p746) target = $region48
        $region47: #{tpu_custom_call.1} parent=39 // pred_region
          %s750 = ssub.s32 128, 128
          %751 = vsyncadd %s742, %s750
          %s752 = smul.addr %s20, 2
          %s753 = smul.addr %s752, 64
          %s754 = scalar_lea.hbm %s5, %s753
          %s756 = sshll.u32 %s745, 4
          %s757 = int_to_ptr.vmem [resolvable:$true] %s756
          %759 = dma.vmem_to_hbm [thread:$0]  %s757, 128, %s754, %s742
        $region48: #{tpu_custom_call.1} parent=39 // pred_fallthru
          _
      $region40: #{tpu_custom_call.1} parent=5 // pred_fallthru
        _
      %p760 = scmp.le.s32.totalorder 2, %s15
      // Predicated region
      $region49: #{tpu_custom_call.1} parent=5 // pred_check
        %p761 = pneg %p760
      $region50: #{tpu_custom_call.1} parent=5 // pred_check_branch
        %763 = sbr.rel (%p761) target = $region52
      $region51: #{tpu_custom_call.1} parent=5 // pred_region
        %s764 = ssub.s32 %s15, 2
        // Predicated region
        $region53: #{tpu_custom_call.1} parent=51 // pred_check
          %p765 = pneg %p154
        $region54: #{tpu_custom_call.1} parent=51 // pred_check_branch
          %767 = sbr.rel (%p765) target = $region56
        $region55: #{tpu_custom_call.1} parent=51 // pred_region
          %s768 = sand.u32 %s139, 1
          %s769 = scalar_lea.sflag [#allocation4], %s768
          %s770 = sand.u32 %s139, 1
          %s771 = smul.addr %s770, 8
          %s772 = scalar_lea.vmem [#allocation5], %s771
          %773 = dma.done %s769, 128
        $region56: #{tpu_custom_call.1} parent=51 // pred_fallthru
          _
      $region52: #{tpu_custom_call.1} parent=5 // pred_fallthru
        _
    $region6: #{tpu_custom_call.1} parent=1 // loop_footer
      %s19 = sadd.s32 1, %s15
    $region7: #{tpu_custom_call.1} parent=1 // loop_footer_branch
      %14 = sbr.rel target = $region3
    $region8: #{tpu_custom_call.1} parent=1 // loop_exit
      _
    %774 = vsyncpa [#allocation3], 1
    %s775 = scalar_lea.sflag [#allocation3], 1
    %776 = vsyncpa %s775, 1
    %777 = vsyncpa [#allocation4], 1
    %s778 = scalar_lea.sflag [#allocation4], 1
    %779 = vsyncpa %s778, 1

</llo_original>
